<compile_context>
chip_gen: v6e
topology: v6e:2x2x1
jax: 0.10.0
libtpu: 0.0.40
codegen_flags: <defaults>
</compile_context>

<pallas_src>
import jax
import jax.numpy as jnp
from jax.experimental import pallas as pl
from jax.experimental.pallas import tpu as pltpu


def _round_up(x, m):
    return (x + m - 1) // m * m


def _cdiv(a, b):
    return -(-a // b)


def mlp_kernel(x_ref, w1_ref, b1_ref, w2_ref, b2_ref, w3_ref, b3_ref, o_ref):
    # Cast the x tile to bf16 in-kernel (VPU), keep f32 accumulation on MXU.
    x = x_ref[...].astype(jnp.bfloat16)

    # fc1 + relu
    h1 = jnp.dot(x, w1_ref[...], preferred_element_type=jnp.float32)
    h1 = jnp.maximum(h1 + b1_ref[...], 0.0)

    # dropout (p=0.5) in eval mode -> identity

    # fc2 + relu (dominant matmul: K=1024, N=256)
    h2 = jnp.dot(h1.astype(jnp.bfloat16), w2_ref[...],
                 preferred_element_type=jnp.float32)
    h2 = jnp.maximum(h2 + b2_ref[...], 0.0)

    # fc3 (no activation), lane-dense padded output width
    out = jnp.dot(h2.astype(jnp.bfloat16), w3_ref[...],
                  preferred_element_type=jnp.float32)
    o_ref[...] = (out + b3_ref[...]).astype(o_ref.dtype)


def prepare_params(w1, b1, w2, b2, w3, b3):
    """One-time weight preparation (hoisted out of the per-call wrapper).

    Casts weights to bf16 for the MXU and pads fc3 width up to a multiple of
    128 for lane-dense (unmasked vst) output stores.  Biases stay f32.
    Returns (params_tuple, out_size).
    """
    out_size = w3.shape[1]
    n_pad = _round_up(out_size, 128)
    if n_pad != out_size:
        w3 = jnp.pad(w3, ((0, 0), (0, n_pad - out_size)))
        b3 = jnp.pad(b3, ((0, 0), (0, n_pad - out_size)))
    params = (
        w1.astype(jnp.bfloat16), b1.astype(jnp.float32),
        w2.astype(jnp.bfloat16), b2.astype(jnp.float32),
        w3.astype(jnp.bfloat16), b3.astype(jnp.float32),
    )
    # Materialize once so no cast/pad work happens per forward call.
    params = jax.tree_util.tree_map(jax.block_until_ready, params)
    return params, out_size


def _choose_tm(B, block_m=512):
    """Pick the batch tile size.

    Tiny batches: one grid step, rounded to the 8-sublane f32 quantum.
    Moderate/large batches: >= 2 grid steps (so v7x's 2 TensorCores engage),
    tile at ceil(B / n_steps) rounded to 16 to bound last-tile padding waste.
    """
    if B <= 128:
        return _round_up(B, 8)
    n_steps = max(2, _cdiv(B, block_m))
    return min(block_m, _round_up(_cdiv(B, n_steps), 16))


def mlp_forward(x, prepped_params, out_size, *, block_m=512):
    """Forward pass. `prepped_params` must come from prepare_params()."""
    w1b, b1, w2b, b2, w3b, b3 = prepped_params
    B, K = x.shape
    n_pad = w3b.shape[1]

    tm = _choose_tm(B, block_m)
    b_pad = _round_up(B, tm)
    if b_pad != B:
        x = jnp.pad(x, ((0, b_pad - B), (0, 0)))

    # Weights/biases: same block every grid step -> stay VMEM-resident.
    resident = lambda a: pl.BlockSpec(a.shape, lambda i: (0, 0))

    out = pl.pallas_call(
        mlp_kernel,
        out_shape=jax.ShapeDtypeStruct((b_pad, n_pad), jnp.float32),
        grid=(b_pad // tm,),
        in_specs=[
            pl.BlockSpec((tm, K), lambda i: (i, 0)),   # x batch tile (f32)
            resident(w1b), resident(b1),
            resident(w2b), resident(b2),
            resident(w3b), resident(b3),
        ],
        out_specs=pl.BlockSpec((tm, n_pad), lambda i: (i, 0)),
        compiler_params=pltpu.CompilerParams(
            dimension_semantics=("parallel",)),
    )(x, w1b, b1, w2b, b2, w3b, b3)

    return out[:B, :out_size]


def init_params(key, input_size, out_size):
    """Deterministic PyTorch-Linear-style init (uniform +-1/sqrt(fan_in))."""
    dims = [(input_size, 1024), (1024, 256), (256, out_size)]
    params = []
    for fan_in, fan_out in dims:
        kw, kb, key = jax.random.split(key, 3)
        bound = 1.0 / jnp.sqrt(fan_in)
        w = jax.random.uniform(kw, (fan_in, fan_out), jnp.float32, -bound, bound)
        b = jax.random.uniform(kb, (1, fan_out), jnp.float32, -bound, bound)
        params += [w, b]
    return params


def ref_forward(x, w1, b1, w2, b2, w3, b3):
    """Plain-JAX reference mimicking the kernel's bf16 operand quantization."""
    bq = lambda a: a.astype(jnp.bfloat16).astype(jnp.float32)
    h1 = jnp.maximum(bq(x) @ bq(w1) + b1, 0.0)
    h2 = jnp.maximum(bq(h1) @ bq(w2) + b2, 0.0)
    return bq(h2) @ bq(w3) + b3


if __name__ == "__main__":
    key = jax.random.PRNGKey(0)
    batch = 8
    input_size = 32
    out_size = 16

    kx, kp = jax.random.split(key)
    x = jax.random.normal(kx, (batch, input_size), dtype=jnp.float32)
    w1, b1, w2, b2, w3, b3 = init_params(kp, input_size, out_size)

    # One-time param prep (bf16 cast + lane-dense pad of fc3), then forward.
    prepped, out_sz = prepare_params(w1, b1, w2, b2, w3, b3)
    out = mlp_forward(x, prepped, out_sz)
    jax.block_until_ready(out)

    ref = ref_forward(x, w1, b1, w2, b2, w3, b3)
    assert out.shape == (batch, out_size)
    assert jnp.allclose(out, ref, atol=1e-2, rtol=1e-2), (
        float(jnp.max(jnp.abs(out - ref))))

    print("KERNEL_OK")
</pallas_src>

<mosaic_0001>
module attributes {stable_mosaic.version = 11 : i64} {
  func.func @mlp_kernel(%arg0: i32, %arg1: memref<8x32xf32, #tpu.memory_space<vmem>>, %arg2: memref<32x1024xbf16, #tpu.memory_space<vmem>>, %arg3: memref<1x1024xf32, #tpu.memory_space<vmem>>, %arg4: memref<1024x256xbf16, #tpu.memory_space<vmem>>, %arg5: memref<1x256xf32, #tpu.memory_space<vmem>>, %arg6: memref<256x128xbf16, #tpu.memory_space<vmem>>, %arg7: memref<1x128xf32, #tpu.memory_space<vmem>>, %arg8: memref<8x128xf32, #tpu.memory_space<vmem>>) attributes {dimension_semantics = [#tpu.dimension_semantics<parallel>], iteration_bounds = array<i64: 1>, scalar_prefetch = 0 : i64, scratch_operands = 0 : i64, tpu.core_type = #tpu.core_type<tc>, window_params = [{transform_indices = @transform_0, window_bounds = array<i64: 8, 32>}, {pipeline_mode = #tpu.pipeline_mode<synchronous>, transform_indices = @transform_1, window_bounds = array<i64: 32, 1024>}, {pipeline_mode = #tpu.pipeline_mode<synchronous>, transform_indices = @transform_2, window_bounds = array<i64: 1, 1024>}, {pipeline_mode = #tpu.pipeline_mode<synchronous>, transform_indices = @transform_3, window_bounds = array<i64: 1024, 256>}, {pipeline_mode = #tpu.pipeline_mode<synchronous>, transform_indices = @transform_4, window_bounds = array<i64: 1, 256>}, {pipeline_mode = #tpu.pipeline_mode<synchronous>, transform_indices = @transform_5, window_bounds = array<i64: 256, 128>}, {pipeline_mode = #tpu.pipeline_mode<synchronous>, transform_indices = @transform_6, window_bounds = array<i64: 1, 128>}, {transform_indices = @transform_7, window_bounds = array<i64: 8, 128>}]} {
    %c0 = arith.constant 0 : index
    %c0_0 = arith.constant 0 : index
    %0 = vector.load %arg1[%c0, %c0_0] : memref<8x32xf32, #tpu.memory_space<vmem>>, vector<8x32xf32>
    %1 = arith.truncf %0 : vector<8x32xf32> to vector<8x32xbf16>
    %c0_1 = arith.constant 0 : index
    %c0_2 = arith.constant 0 : index
    %2 = vector.load %arg2[%c0_1, %c0_2] : memref<32x1024xbf16, #tpu.memory_space<vmem>>, vector<32x1024xbf16>
    %cst = arith.constant dense<0.000000e+00> : vector<8x1024xf32>
    %3 = tpu.matmul %1, %2, %cst {dimension_numbers = #tpu.dot_dimension_numbers<[1], [0], [0], [1], [0, 0, 1, 1], [], []>} : vector<8x32xbf16>, vector<32x1024xbf16>, vector<8x1024xf32> -> vector<8x1024xf32>
    %c0_3 = arith.constant 0 : index
    %c0_4 = arith.constant 0 : index
    %4 = vector.load %arg3[%c0_3, %c0_4] : memref<1x1024xf32, #tpu.memory_space<vmem>>, vector<1x1024xf32>
    %5 = vector.broadcast %4 : vector<1x1024xf32> to vector<8x1024xf32>
    %6 = arith.addf %3, %5 : vector<8x1024xf32>
    %cst_5 = arith.constant 0.000000e+00 : f32
    %7 = vector.broadcast %cst_5 : f32 to vector<8x1024xf32>
    %8 = arith.maximumf %6, %7 : vector<8x1024xf32>
    %9 = arith.truncf %8 : vector<8x1024xf32> to vector<8x1024xbf16>
    %c0_6 = arith.constant 0 : index
    %c0_7 = arith.constant 0 : index
    %10 = vector.load %arg4[%c0_6, %c0_7] : memref<1024x256xbf16, #tpu.memory_space<vmem>>, vector<1024x256xbf16>
    %cst_8 = arith.constant dense<0.000000e+00> : vector<8x256xf32>
    %11 = tpu.matmul %9, %10, %cst_8 {dimension_numbers = #tpu.dot_dimension_numbers<[1], [0], [0], [1], [0, 0, 1, 1], [], []>} : vector<8x1024xbf16>, vector<1024x256xbf16>, vector<8x256xf32> -> vector<8x256xf32>
    %c0_9 = arith.constant 0 : index
    %c0_10 = arith.constant 0 : index
    %12 = vector.load %arg5[%c0_9, %c0_10] : memref<1x256xf32, #tpu.memory_space<vmem>>, vector<1x256xf32>
    %13 = vector.broadcast %12 : vector<1x256xf32> to vector<8x256xf32>
    %14 = arith.addf %11, %13 : vector<8x256xf32>
    %cst_11 = arith.constant 0.000000e+00 : f32
    %15 = vector.broadcast %cst_11 : f32 to vector<8x256xf32>
    %16 = arith.maximumf %14, %15 : vector<8x256xf32>
    %17 = arith.truncf %16 : vector<8x256xf32> to vector<8x256xbf16>
    %c0_12 = arith.constant 0 : index
    %c0_13 = arith.constant 0 : index
    %18 = vector.load %arg6[%c0_12, %c0_13] : memref<256x128xbf16, #tpu.memory_space<vmem>>, vector<256x128xbf16>
    %cst_14 = arith.constant dense<0.000000e+00> : vector<8x128xf32>
    %19 = tpu.matmul %17, %18, %cst_14 {dimension_numbers = #tpu.dot_dimension_numbers<[1], [0], [0], [1], [0, 0, 1, 1], [], []>} : vector<8x256xbf16>, vector<256x128xbf16>, vector<8x128xf32> -> vector<8x128xf32>
    %c0_15 = arith.constant 0 : index
    %c0_16 = arith.constant 0 : index
    %20 = vector.load %arg7[%c0_15, %c0_16] : memref<1x128xf32, #tpu.memory_space<vmem>>, vector<1x128xf32>
    %21 = vector.broadcast %20 : vector<1x128xf32> to vector<8x128xf32>
    %22 = arith.addf %19, %21 : vector<8x128xf32>
    %c0_17 = arith.constant 0 : index
    %c0_18 = arith.constant 0 : index
    %23 = vector.load %arg8[%c0_17, %c0_18] : memref<8x128xf32, #tpu.memory_space<vmem>>, vector<8x128xf32>
    tpu.vector_store %arg8[%c0_17, %c0_18], %22 {strides = array<i32>} : memref<8x128xf32, #tpu.memory_space<vmem>>, vector<8x128xf32>,
    return
  }
  func.func @transform_0(%arg0: i32) -> (i32, i32) {
    %c0_i32 = arith.constant 0 : i32
    %c0_i32_0 = arith.constant 0 : i32
    return %arg0, %c0_i32 : i32, i32
  }
  func.func @transform_1(%arg0: i32) -> (i32, i32) {
    %c0_i32 = arith.constant 0 : i32
    %c0_i32_0 = arith.constant 0 : i32
    %c0_i32_1 = arith.constant 0 : i32
    return %c0_i32, %c0_i32_0 : i32, i32
  }
  func.func @transform_2(%arg0: i32) -> (i32, i32) {
    %c0_i32 = arith.constant 0 : i32
    %c0_i32_0 = arith.constant 0 : i32
    %c0_i32_1 = arith.constant 0 : i32
    return %c0_i32, %c0_i32_0 : i32, i32
  }
  func.func @transform_3(%arg0: i32) -> (i32, i32) {
    %c0_i32 = arith.constant 0 : i32
    %c0_i32_0 = arith.constant 0 : i32
    %c0_i32_1 = arith.constant 0 : i32
    return %c0_i32, %c0_i32_0 : i32, i32
  }
  func.func @transform_4(%arg0: i32) -> (i32, i32) {
    %c0_i32 = arith.constant 0 : i32
    %c0_i32_0 = arith.constant 0 : i32
    %c0_i32_1 = arith.constant 0 : i32
    return %c0_i32, %c0_i32_0 : i32, i32
  }
  func.func @transform_5(%arg0: i32) -> (i32, i32) {
    %c0_i32 = arith.constant 0 : i32
    %c0_i32_0 = arith.constant 0 : i32
    %c0_i32_1 = arith.constant 0 : i32
    return %c0_i32, %c0_i32_0 : i32, i32
  }
  func.func @transform_6(%arg0: i32) -> (i32, i32) {
    %c0_i32 = arith.constant 0 : i32
    %c0_i32_0 = arith.constant 0 : i32
    %c0_i32_1 = arith.constant 0 : i32
    return %c0_i32, %c0_i32_0 : i32, i32
  }
  func.func @transform_7(%arg0: i32) -> (i32, i32) {
    %c0_i32 = arith.constant 0 : i32
    %c0_i32_0 = arith.constant 0 : i32
    return %arg0, %c0_i32 : i32, i32
  }
}

</mosaic_0001>

<llo_original>
// kernel: tpu_custom_call.1
$region0: #{tpu_custom_call.1}
  #allocation0 [shape = 'u32[]', space=smem, size = 0x4, offset = 0x4, fixed_abs, tag = 'smem constant byte address 0x4 - core index']
  #allocation1 [shape = 'u32[144,128]{1,0:T(1,128)}', space=vmem, size = 0x12000, scoped, tag = 'internal scratch']
  %s0 = inlined_call_operand.hbm [shape: f32[8,32], index: 0, kind: input, shape index: {}]
  %s1 = inlined_call_operand.hbm [shape: bf16[32,1024], index: 1, kind: input, shape index: {}]
  %s2 = inlined_call_operand.hbm [shape: f32[1,1024], index: 2, kind: input, shape index: {}]
  %s3 = inlined_call_operand.hbm [shape: bf16[1024,256], index: 3, kind: input, shape index: {}]
  %s4 = inlined_call_operand.vmem [shape: f32[1,256], index: 4, kind: input, shape index: {}]
  %s5 = inlined_call_operand.hbm [shape: bf16[256,128], index: 5, kind: input, shape index: {}]
  %s6 = inlined_call_operand.vmem [shape: f32[1,128], index: 6, kind: input, shape index: {}]
  %s7 = inlined_call_operand.hbm [shape: f32[8,128], index: 7, kind: output, shape index: {}]
  %s8 = sld [smem:[#allocation0]]
  $region58: #{tpu_custom_call.1} parent=0
    _
  %s10 = ssub.s32 1, %s8
  %s11 = scalar_select 0, %s10, %s8
  $region1: #{tpu_custom_call.1} parent=0
    #allocation2 [shape = 'u8[4096]{0}', space=vmem, size = 0x1000, scoped, tag = 'input window, operand 0, single buffered']
    #allocation3 [shape = 's32[1]{0}', space=sflag, size = 0x4, scoped, tag = 'scoped memory for tpu_custom_call.1']
    #allocation4 [shape = 's32[1]{0}', space=sflag, size = 0x4, scoped, tag = 'scoped memory for tpu_custom_call.1']
    #allocation5 [shape = 'u8[65536]{0}', space=vmem, size = 0x10000, scoped, tag = 'input window, operand 1, single buffered']
    #allocation6 [shape = 's32[1]{0}', space=sflag, size = 0x4, scoped, tag = 'scoped memory for tpu_custom_call.1']
    #allocation7 [shape = 'u8[4096]{0}', space=vmem, size = 0x1000, scoped, tag = 'input window, operand 2, single buffered']
    #allocation8 [shape = 'u8[524288]{0}', space=vmem, size = 0x80000, scoped, tag = 'input window, operand 3, single buffered']
    #allocation9 [shape = 's32[1]{0}', space=sflag, size = 0x4, scoped, tag = 'scoped memory for tpu_custom_call.1']
    #allocation10 [shape = 'u8[65536]{0}', space=vmem, size = 0x10000, scoped, tag = 'input window, operand 5, single buffered']
    #allocation11 [shape = 'u8[4096]{0}', space=vmem, size = 0x1000, scoped, tag = 'output window, operand 0, single buffered']
    %12 = vsyncpa [#allocation3], 0
    %13 = vsyncpa [#allocation6], 0
    %14 = vsyncpa [#allocation9], 0
    %15 = vsyncpa [#allocation4], 0
    // Predicated region
    $region2: #{tpu_custom_call.1} parent=1 // pred_check
      _
    $region3: #{tpu_custom_call.1} parent=1 // pred_check_branch
      %17 = sbr.rel (0) target = $region5
    $region4: #{tpu_custom_call.1} parent=1 // pred_region
      %s19 = ssub.s32 128, 128
      %20 = vsyncadd [#allocation3], %s19
      %s22 = sshll.u32 [#allocation2], 4
      %s23 = int_to_ptr.vmem [resolvable:$true] %s22
      %25 = dma.hbm_to_vmem [thread:$0]  %s0, 128, %s23, [#allocation3]
    $region5: #{tpu_custom_call.1} parent=1 // pred_fallthru
      _
    // Predicated region
    $region6: #{tpu_custom_call.1} parent=1 // pred_check
      _
    $region7: #{tpu_custom_call.1} parent=1 // pred_check_branch
      %27 = sbr.rel (0) target = $region9
    $region8: #{tpu_custom_call.1} parent=1 // pred_region
      %s29 = ssub.s32 2048, 2048
      %30 = vsyncadd [#allocation6], %s29
      %s31 = sshll.u32 [#allocation5], 4
      %s32 = int_to_ptr.vmem [resolvable:$true] %s31
      %37 = dma.hbm_to_vmem [thread:$0]  %s1, 2048, %s32, [#allocation6], 512, 512, 32
    $region9: #{tpu_custom_call.1} parent=1 // pred_fallthru
      _
    // Predicated region
    $region10: #{tpu_custom_call.1} parent=1 // pred_check
      _
    $region11: #{tpu_custom_call.1} parent=1 // pred_check_branch
      %39 = sbr.rel (0) target = $region13
    $region12: #{tpu_custom_call.1} parent=1 // pred_region
      %s41 = ssub.s32 128, 128
      %42 = vsyncadd [#allocation6], %s41
      %s44 = sshll.u32 [#allocation7], 4
      %s45 = int_to_ptr.vmem [resolvable:$true] %s44
      %47 = dma.hbm_to_vmem [thread:$0]  %s2, 128, %s45, [#allocation6]
    $region13: #{tpu_custom_call.1} parent=1 // pred_fallthru
      _
    // Predicated region
    $region14: #{tpu_custom_call.1} parent=1 // pred_check
      _
    $region15: #{tpu_custom_call.1} parent=1 // pred_check_branch
      %49 = sbr.rel (0) target = $region17
    $region16: #{tpu_custom_call.1} parent=1 // pred_region
      %s51 = ssub.s32 16384, 16384
      %52 = vsyncadd [#allocation9], %s51
      %s53 = sshll.u32 [#allocation8], 4
      %s54 = int_to_ptr.vmem [resolvable:$true] %s53
      %59 = dma.hbm_to_vmem [thread:$0]  %s3, 16384, %s54, [#allocation9], 128, 128, 8
    $region17: #{tpu_custom_call.1} parent=1 // pred_fallthru
      _
    // Predicated region
    $region18: #{tpu_custom_call.1} parent=1 // pred_check
      _
    $region19: #{tpu_custom_call.1} parent=1 // pred_check_branch
      %61 = sbr.rel (0) target = $region21
    $region20: #{tpu_custom_call.1} parent=1 // pred_region
      _
    $region21: #{tpu_custom_call.1} parent=1 // pred_fallthru
      _
    // Predicated region
    $region22: #{tpu_custom_call.1} parent=1 // pred_check
      _
    $region23: #{tpu_custom_call.1} parent=1 // pred_check_branch
      %63 = sbr.rel (0) target = $region25
    $region24: #{tpu_custom_call.1} parent=1 // pred_region
      %s65 = ssub.s32 2048, 2048
      %66 = vsyncadd [#allocation9], %s65
      %s67 = sshll.u32 [#allocation10], 4
      %s68 = int_to_ptr.vmem [resolvable:$true] %s67
      %73 = dma.hbm_to_vmem [thread:$0]  %s5, 2048, %s68, [#allocation9], 64, 64, 4
    $region25: #{tpu_custom_call.1} parent=1 // pred_fallthru
      _
    // Predicated region
    $region26: #{tpu_custom_call.1} parent=1 // pred_check
      _
    $region27: #{tpu_custom_call.1} parent=1 // pred_check_branch
      %75 = sbr.rel (0) target = $region29
    $region28: #{tpu_custom_call.1} parent=1 // pred_region
      _
    $region29: #{tpu_custom_call.1} parent=1 // pred_fallthru
      _
    // Predicated region
    $region30: #{tpu_custom_call.1} parent=1 // pred_check
      _
    $region31: #{tpu_custom_call.1} parent=1 // pred_check_branch
      %77 = sbr.rel (0) target = $region33
    $region32: #{tpu_custom_call.1} parent=1 // pred_region
      %78 = dma.done [#allocation3], 128
    $region33: #{tpu_custom_call.1} parent=1 // pred_fallthru
      _
    // Predicated region
    $region34: #{tpu_custom_call.1} parent=1 // pred_check
      _
    $region35: #{tpu_custom_call.1} parent=1 // pred_check_branch
      %80 = sbr.rel (0) target = $region37
    $region36: #{tpu_custom_call.1} parent=1 // pred_region
      %81 = dma.done [#allocation6], 2048
    $region37: #{tpu_custom_call.1} parent=1 // pred_fallthru
      _
    // Predicated region
    $region38: #{tpu_custom_call.1} parent=1 // pred_check
      _
    $region39: #{tpu_custom_call.1} parent=1 // pred_check_branch
      %83 = sbr.rel (0) target = $region41
    $region40: #{tpu_custom_call.1} parent=1 // pred_region
      %84 = dma.done [#allocation6], 128
    $region41: #{tpu_custom_call.1} parent=1 // pred_fallthru
      _
    // Predicated region
    $region42: #{tpu_custom_call.1} parent=1 // pred_check
      _
    $region43: #{tpu_custom_call.1} parent=1 // pred_check_branch
      %86 = sbr.rel (0) target = $region45
    $region44: #{tpu_custom_call.1} parent=1 // pred_region
      %87 = dma.done [#allocation9], 16384
    $region45: #{tpu_custom_call.1} parent=1 // pred_fallthru
      _
    // Predicated region
    $region46: #{tpu_custom_call.1} parent=1 // pred_check
      _
    $region47: #{tpu_custom_call.1} parent=1 // pred_check_branch
      %89 = sbr.rel (0) target = $region49
    $region48: #{tpu_custom_call.1} parent=1 // pred_region
      %90 = dma.done [#allocation9], 2048
    $region49: #{tpu_custom_call.1} parent=1 // pred_fallthru
      _
    %v92 = vld [vmem:[#allocation2] sm:$0xff]
    %v93 = vpack.c.bf16 %v92, %v92
    %v94 = vld [vmem:[#allocation5] sm:$0xff]
    %v95 = vld [vmem:[#allocation5 + $0x8] sm:$0xff]
    %v96 = vld [vmem:[#allocation5 + $0x10] sm:$0xff]
    %v97 = vld [vmem:[#allocation5 + $0x18] sm:$0xff]
    %v98 = vld [vmem:[#allocation5 + $0x20] sm:$0xff]
    %v99 = vld [vmem:[#allocation5 + $0x28] sm:$0xff]
    %v100 = vld [vmem:[#allocation5 + $0x30] sm:$0xff]
    %v101 = vld [vmem:[#allocation5 + $0x38] sm:$0xff]
    %v102 = vld [vmem:[#allocation5 + $0x40] sm:$0xff]
    %v103 = vld [vmem:[#allocation5 + $0x48] sm:$0xff]
    %v104 = vld [vmem:[#allocation5 + $0x50] sm:$0xff]
    %v105 = vld [vmem:[#allocation5 + $0x58] sm:$0xff]
    %v106 = vld [vmem:[#allocation5 + $0x60] sm:$0xff]
    %v107 = vld [vmem:[#allocation5 + $0x68] sm:$0xff]
    %v108 = vld [vmem:[#allocation5 + $0x70] sm:$0xff]
    %v109 = vld [vmem:[#allocation5 + $0x78] sm:$0xff]
    %v110 = vld [vmem:[#allocation7] sm:$0xff]
    %v112 = vlaneseq
    %v113 = vshrl.u32 %v112, 7
    %v114 = vsub.s32 0, %v113
    %v115 = vrot.slane %v110, %v114
    %v116 = vlaneseq
    %v117 = vshrl.u32 %v116, 7
    %v118 = vsub.s32 1, %v117
    %v119 = vrot.slane %v110, %v118
    %v120 = vlaneseq
    %v121 = vshrl.u32 %v120, 7
    %v122 = vsub.s32 2, %v121
    %v123 = vrot.slane %v110, %v122
    %v124 = vlaneseq
    %v125 = vshrl.u32 %v124, 7
    %v126 = vsub.s32 3, %v125
    %v127 = vrot.slane %v110, %v126
    %v128 = vlaneseq
    %v129 = vshrl.u32 %v128, 7
    %v130 = vsub.s32 4, %v129
    %v131 = vrot.slane %v110, %v130
    %v132 = vlaneseq
    %v133 = vshrl.u32 %v132, 7
    %v134 = vsub.s32 5, %v133
    %v135 = vrot.slane %v110, %v134
    %v136 = vlaneseq
    %v137 = vshrl.u32 %v136, 7
    %v138 = vsub.s32 6, %v137
    %v139 = vrot.slane %v110, %v138
    %v140 = vlaneseq
    %v141 = vshrl.u32 %v140, 7
    %v142 = vsub.s32 7, %v141
    %v143 = vrot.slane %v110, %v142
    %v168 = vunpack.c.l.b16 %v94
    %v169 = vunpack.c.h.b16 %v94
    %v170 = vunpack.c.l.b16 %v95
    %v171 = vunpack.c.h.b16 %v95
    %v172 = vunpack.c.l.b16 %v96
    %v173 = vunpack.c.h.b16 %v96
    %v174 = vunpack.c.l.b16 %v97
    %v175 = vunpack.c.h.b16 %v97
    %v176 = vunpack.c.l.b16 %v98
    %v177 = vunpack.c.h.b16 %v98
    %v178 = vunpack.c.l.b16 %v99
    %v179 = vunpack.c.h.b16 %v99
    %v180 = vunpack.c.l.b16 %v100
    %v181 = vunpack.c.h.b16 %v100
    %v182 = vunpack.c.l.b16 %v101
    %v183 = vunpack.c.h.b16 %v101
    %v184 = vunpack.c.l.b16 %v102
    %v185 = vunpack.c.h.b16 %v102
    %v186 = vunpack.c.l.b16 %v103
    %v187 = vunpack.c.h.b16 %v103
    %v188 = vunpack.c.l.b16 %v104
    %v189 = vunpack.c.h.b16 %v104
    %v190 = vunpack.c.l.b16 %v105
    %v191 = vunpack.c.h.b16 %v105
    %v192 = vunpack.c.l.b16 %v106
    %v193 = vunpack.c.h.b16 %v106
    %v194 = vunpack.c.l.b16 %v107
    %v195 = vunpack.c.h.b16 %v107
    %v196 = vunpack.c.l.b16 %v108
    %v197 = vunpack.c.h.b16 %v108
    %v198 = vunpack.c.l.b16 %v109
    %v199 = vunpack.c.h.b16 %v109
    %v200 = vpack.c.b16 %v176, %v168
    %v201 = vpack.c.b16 %v177, %v169
    %v202 = vpack.c.b16 %v178, %v170
    %v203 = vpack.c.b16 %v179, %v171
    %v204 = vpack.c.b16 %v180, %v172
    %v205 = vpack.c.b16 %v181, %v173
    %v206 = vpack.c.b16 %v182, %v174
    %v207 = vpack.c.b16 %v183, %v175
    %v208 = vpack.c.b16 %v192, %v184
    %v209 = vpack.c.b16 %v193, %v185
    %v210 = vpack.c.b16 %v194, %v186
    %v211 = vpack.c.b16 %v195, %v187
    %v212 = vpack.c.b16 %v196, %v188
    %v213 = vpack.c.b16 %v197, %v189
    %v214 = vpack.c.b16 %v198, %v190
    %v215 = vpack.c.b16 %v199, %v191
    %vm232 = vcmask 261120
    %v234 = vsel %vm232, %v93, 0
    %236 = vmatprep.subr.bf16.mxu0 0
    %237 = vmatpush1.bf16.msra.mxu0 0
    %238 = vmatprep.subr.bf16.mxu0 0
    %239 = vmatpush1.bf16.msra.mxu0 0
    %240 = vmatprep.subr.bf16.mxu0 0
    %241 = vmatpush1.bf16.msra.mxu0 0
    %242 = vmatprep.subr.bf16.mxu0 0
    %243 = vmatpush1.bf16.msra.mxu0 0
    %244 = vmatprep.subr.bf16.mxu0 0
    %245 = vmatpush1.bf16.msra.mxu0 0
    %246 = vmatprep.subr.bf16.mxu0 0
    %247 = vmatpush1.bf16.msra.mxu0 0
    %248 = vmatprep.subr.bf16.mxu0 %v209
    %249 = vmatpush1.bf16.msra.mxu0 %v208
    %250 = vmatprep.subr.bf16.mxu0 %v201
    %251 = vmatpush1.bf16.msra.mxu0 %v200
    %252 = vmatprep.subr.bf16.mxu0 0
    %253 = vmatpush2.bf16.msra.mxu0 0
    %254 = vmatprep.subr.bf16.mxu0 0
    %255 = vmatpush2.bf16.msra.mxu0 0
    %256 = vmatprep.subr.bf16.mxu0 0
    %257 = vmatpush2.bf16.msra.mxu0 0
    %258 = vmatprep.subr.bf16.mxu0 0
    %259 = vmatpush2.bf16.msra.mxu0 0
    %260 = vmatprep.subr.bf16.mxu0 0
    %261 = vmatpush2.bf16.msra.mxu0 0
    %262 = vmatprep.subr.bf16.mxu0 0
    %263 = vmatpush2.bf16.msra.mxu0 0
    %264 = vmatprep.subr.bf16.mxu0 0
    %265 = vmatpush2.bf16.msra.mxu0 0
    %266 = vmatprep.subr.bf16.mxu0 0
    %267 = vmatpush2.bf16.msra.mxu0 0
    %268 = vmatprep.mubr.bf16.mxu0 0
    %269 = vmatmul.mubr.bf16.gmra.mxu0 %v234
    %v270 = vpop.f32.mrf.mxu0
    %v271 = vadd.f32 %v115, %v270
    %v272 = vpop.f32.mrf.mxu0
    %v273 = vadd.f32 %v119, %v272
    %v274 = vpop.f32.mrf.mxu0
    %v275 = vpop.f32.mrf.mxu0
    %276 = vdwg.mxu0
    %277 = vmatprep.subr.bf16.mxu0 0
    %278 = vmatpush1.bf16.msra.mxu0 0
    %279 = vmatprep.subr.bf16.mxu0 0
    %280 = vmatpush1.bf16.msra.mxu0 0
    %281 = vmatprep.subr.bf16.mxu0 0
    %282 = vmatpush1.bf16.msra.mxu0 0
    %283 = vmatprep.subr.bf16.mxu0 0
    %284 = vmatpush1.bf16.msra.mxu0 0
    %285 = vmatprep.subr.bf16.mxu0 0
    %286 = vmatpush1.bf16.msra.mxu0 0
    %287 = vmatprep.subr.bf16.mxu0 0
    %288 = vmatpush1.bf16.msra.mxu0 0
    %289 = vmatprep.subr.bf16.mxu0 %v211
    %290 = vmatpush1.bf16.msra.mxu0 %v210
    %291 = vmatprep.subr.bf16.mxu0 %v203
    %292 = vmatpush1.bf16.msra.mxu0 %v202
    %293 = vmatprep.subr.bf16.mxu0 0
    %294 = vmatpush2.bf16.msra.mxu0 0
    %295 = vmatprep.subr.bf16.mxu0 0
    %296 = vmatpush2.bf16.msra.mxu0 0
    %297 = vmatprep.subr.bf16.mxu0 0
    %298 = vmatpush2.bf16.msra.mxu0 0
    %299 = vmatprep.subr.bf16.mxu0 0
    %300 = vmatpush2.bf16.msra.mxu0 0
    %301 = vmatprep.subr.bf16.mxu0 0
    %302 = vmatpush2.bf16.msra.mxu0 0
    %303 = vmatprep.subr.bf16.mxu0 0
    %304 = vmatpush2.bf16.msra.mxu0 0
    %305 = vmatprep.subr.bf16.mxu0 0
    %306 = vmatpush2.bf16.msra.mxu0 0
    %307 = vmatprep.subr.bf16.mxu0 0
    %308 = vmatpush2.bf16.msra.mxu0 0
    %309 = vmatprep.mubr.bf16.mxu0 0
    %310 = vmatmul.mubr.bf16.gmra.mxu0 %v234
    %v311 = vpop.f32.mrf.mxu0
    %v312 = vadd.f32 %v123, %v311
    %v313 = vpop.f32.mrf.mxu0
    %v314 = vadd.f32 %v127, %v313
    %v315 = vpop.f32.mrf.mxu0
    %v316 = vpop.f32.mrf.mxu0
    %317 = vdwg.mxu0
    %318 = vmatprep.subr.bf16.mxu0 0
    %319 = vmatpush1.bf16.msra.mxu0 0
    %320 = vmatprep.subr.bf16.mxu0 0
    %321 = vmatpush1.bf16.msra.mxu0 0
    %322 = vmatprep.subr.bf16.mxu0 0
    %323 = vmatpush1.bf16.msra.mxu0 0
    %324 = vmatprep.subr.bf16.mxu0 0
    %325 = vmatpush1.bf16.msra.mxu0 0
    %326 = vmatprep.subr.bf16.mxu0 0
    %327 = vmatpush1.bf16.msra.mxu0 0
    %328 = vmatprep.subr.bf16.mxu0 0
    %329 = vmatpush1.bf16.msra.mxu0 0
    %330 = vmatprep.subr.bf16.mxu0 %v213
    %331 = vmatpush1.bf16.msra.mxu0 %v212
    %332 = vmatprep.subr.bf16.mxu0 %v205
    %333 = vmatpush1.bf16.msra.mxu0 %v204
    %334 = vmatprep.subr.bf16.mxu0 0
    %335 = vmatpush2.bf16.msra.mxu0 0
    %336 = vmatprep.subr.bf16.mxu0 0
    %337 = vmatpush2.bf16.msra.mxu0 0
    %338 = vmatprep.subr.bf16.mxu0 0
    %339 = vmatpush2.bf16.msra.mxu0 0
    %340 = vmatprep.subr.bf16.mxu0 0
    %341 = vmatpush2.bf16.msra.mxu0 0
    %342 = vmatprep.subr.bf16.mxu0 0
    %343 = vmatpush2.bf16.msra.mxu0 0
    %344 = vmatprep.subr.bf16.mxu0 0
    %345 = vmatpush2.bf16.msra.mxu0 0
    %346 = vmatprep.subr.bf16.mxu0 0
    %347 = vmatpush2.bf16.msra.mxu0 0
    %348 = vmatprep.subr.bf16.mxu0 0
    %349 = vmatpush2.bf16.msra.mxu0 0
    %350 = vmatprep.mubr.bf16.mxu0 0
    %351 = vmatmul.mubr.bf16.gmra.mxu0 %v234
    %v352 = vpop.f32.mrf.mxu0
    %v353 = vadd.f32 %v131, %v352
    %v354 = vpop.f32.mrf.mxu0
    %v355 = vadd.f32 %v135, %v354
    %v356 = vpop.f32.mrf.mxu0
    %v357 = vpop.f32.mrf.mxu0
    %358 = vdwg.mxu0
    %359 = vmatprep.subr.bf16.mxu0 0
    %360 = vmatpush1.bf16.msra.mxu0 0
    %361 = vmatprep.subr.bf16.mxu0 0
    %362 = vmatpush1.bf16.msra.mxu0 0
    %363 = vmatprep.subr.bf16.mxu0 0
    %364 = vmatpush1.bf16.msra.mxu0 0
    %365 = vmatprep.subr.bf16.mxu0 0
    %366 = vmatpush1.bf16.msra.mxu0 0
    %367 = vmatprep.subr.bf16.mxu0 0
    %368 = vmatpush1.bf16.msra.mxu0 0
    %369 = vmatprep.subr.bf16.mxu0 0
    %370 = vmatpush1.bf16.msra.mxu0 0
    %371 = vmatprep.subr.bf16.mxu0 %v215
    %372 = vmatpush1.bf16.msra.mxu0 %v214
    %373 = vmatprep.subr.bf16.mxu0 %v207
    %374 = vmatpush1.bf16.msra.mxu0 %v206
    %375 = vmatprep.subr.bf16.mxu0 0
    %376 = vmatpush2.bf16.msra.mxu0 0
    %377 = vmatprep.subr.bf16.mxu0 0
    %378 = vmatpush2.bf16.msra.mxu0 0
    %379 = vmatprep.subr.bf16.mxu0 0
    %380 = vmatpush2.bf16.msra.mxu0 0
    %381 = vmatprep.subr.bf16.mxu0 0
    %382 = vmatpush2.bf16.msra.mxu0 0
    %383 = vmatprep.subr.bf16.mxu0 0
    %384 = vmatpush2.bf16.msra.mxu0 0
    %385 = vmatprep.subr.bf16.mxu0 0
    %386 = vmatpush2.bf16.msra.mxu0 0
    %387 = vmatprep.subr.bf16.mxu0 0
    %388 = vmatpush2.bf16.msra.mxu0 0
    %389 = vmatprep.subr.bf16.mxu0 0
    %390 = vmatpush2.bf16.msra.mxu0 0
    %391 = vmatprep.mubr.bf16.mxu0 0
    %392 = vmatmul.mubr.bf16.gmra.mxu0 %v234
    %v393 = vpop.f32.mrf.mxu0
    %v394 = vadd.f32 %v139, %v393
    %v395 = vpop.f32.mrf.mxu0
    %v396 = vadd.f32 %v143, %v395
    %v397 = vpop.f32.mrf.mxu0
    %v398 = vpop.f32.mrf.mxu0
    %399 = vdwg.mxu0
    %v400 = vmax.f32 %v271, 0.0
    %v401 = vmax.f32 %v273, 0.0
    %v402 = vmax.f32 %v312, 0.0
    %v403 = vmax.f32 %v314, 0.0
    %v404 = vmax.f32 %v353, 0.0
    %v405 = vmax.f32 %v355, 0.0
    %v406 = vmax.f32 %v394, 0.0
    %v407 = vmax.f32 %v396, 0.0
    %v408 = vpack.c.bf16 %v400, %v400
    %v409 = vpack.c.bf16 %v401, %v401
    %v410 = vpack.c.bf16 %v402, %v402
    %v411 = vpack.c.bf16 %v403, %v403
    %v412 = vpack.c.bf16 %v404, %v404
    %v413 = vpack.c.bf16 %v405, %v405
    %v414 = vpack.c.bf16 %v406, %v406
    %v415 = vpack.c.bf16 %v407, %v407
    %v416 = vld [vmem:[#allocation8] sm:$0xff]
    %v417 = vld [vmem:[#allocation8 + $0x8] sm:$0xff]
    %v418 = vld [vmem:[#allocation8 + $0x10] sm:$0xff]
    %v419 = vld [vmem:[#allocation8 + $0x18] sm:$0xff]
    %v420 = vld [vmem:[#allocation8 + $0x20] sm:$0xff]
    %v421 = vld [vmem:[#allocation8 + $0x28] sm:$0xff]
    %v422 = vld [vmem:[#allocation8 + $0x30] sm:$0xff]
    %v423 = vld [vmem:[#allocation8 + $0x38] sm:$0xff]
    %v424 = vld [vmem:[#allocation8 + $0x40] sm:$0xff]
    %v425 = vld [vmem:[#allocation8 + $0x48] sm:$0xff]
    %v426 = vld [vmem:[#allocation8 + $0x50] sm:$0xff]
    %v427 = vld [vmem:[#allocation8 + $0x58] sm:$0xff]
    %v428 = vld [vmem:[#allocation8 + $0x60] sm:$0xff]
    %v429 = vld [vmem:[#allocation8 + $0x68] sm:$0xff]
    %v430 = vld [vmem:[#allocation8 + $0x70] sm:$0xff]
    %v431 = vld [vmem:[#allocation8 + $0x78] sm:$0xff]
    %v432 = vld [vmem:[#allocation8 + $0x80] sm:$0xff]
    %v433 = vld [vmem:[#allocation8 + $0x88] sm:$0xff]
    %v434 = vld [vmem:[#allocation8 + $0x90] sm:$0xff]
    %v435 = vld [vmem:[#allocation8 + $0x98] sm:$0xff]
    %v436 = vld [vmem:[#allocation8 + $0xa0] sm:$0xff]
    %v437 = vld [vmem:[#allocation8 + $0xa8] sm:$0xff]
    %v438 = vld [vmem:[#allocation8 + $0xb0] sm:$0xff]
    %v439 = vld [vmem:[#allocation8 + $0xb8] sm:$0xff]
    %v440 = vld [vmem:[#allocation8 + $0xc0] sm:$0xff]
    %v441 = vld [vmem:[#allocation8 + $0xc8] sm:$0xff]
    %v442 = vld [vmem:[#allocation8 + $0xd0] sm:$0xff]
    %v443 = vld [vmem:[#allocation8 + $0xd8] sm:$0xff]
    %v444 = vld [vmem:[#allocation8 + $0xe0] sm:$0xff]
    %v445 = vld [vmem:[#allocation8 + $0xe8] sm:$0xff]
    %v446 = vld [vmem:[#allocation8 + $0xf0] sm:$0xff]
    %v447 = vld [vmem:[#allocation8 + $0xf8] sm:$0xff]
    %v448 = vld [vmem:[#allocation8 + $0x100] sm:$0xff]
    %v449 = vld [vmem:[#allocation8 + $0x108] sm:$0xff]
    %v450 = vld [vmem:[#allocation8 + $0x110] sm:$0xff]
    %v451 = vld [vmem:[#allocation8 + $0x118] sm:$0xff]
    %v452 = vld [vmem:[#allocation8 + $0x120] sm:$0xff]
    %v453 = vld [vmem:[#allocation8 + $0x128] sm:$0xff]
    %v454 = vld [vmem:[#allocation8 + $0x130] sm:$0xff]
    %v455 = vld [vmem:[#allocation8 + $0x138] sm:$0xff]
    %v456 = vld [vmem:[#allocation8 + $0x140] sm:$0xff]
    %v457 = vld [vmem:[#allocation8 + $0x148] sm:$0xff]
    %v458 = vld [vmem:[#allocation8 + $0x150] sm:$0xff]
    %v459 = vld [vmem:[#allocation8 + $0x158] sm:$0xff]
    %v460 = vld [vmem:[#allocation8 + $0x160] sm:$0xff]
    %v461 = vld [vmem:[#allocation8 + $0x168] sm:$0xff]
    %v462 = vld [vmem:[#allocation8 + $0x170] sm:$0xff]
    %v463 = vld [vmem:[#allocation8 + $0x178] sm:$0xff]
    %v464 = vld [vmem:[#allocation8 + $0x180] sm:$0xff]
    %v465 = vld [vmem:[#allocation8 + $0x188] sm:$0xff]
    %v466 = vld [vmem:[#allocation8 + $0x190] sm:$0xff]
    %v467 = vld [vmem:[#allocation8 + $0x198] sm:$0xff]
    %v468 = vld [vmem:[#allocation8 + $0x1a0] sm:$0xff]
    %v469 = vld [vmem:[#allocation8 + $0x1a8] sm:$0xff]
    %v470 = vld [vmem:[#allocation8 + $0x1b0] sm:$0xff]
    %v471 = vld [vmem:[#allocation8 + $0x1b8] sm:$0xff]
    %v472 = vld [vmem:[#allocation8 + $0x1c0] sm:$0xff]
    %v473 = vld [vmem:[#allocation8 + $0x1c8] sm:$0xff]
    %v474 = vld [vmem:[#allocation8 + $0x1d0] sm:$0xff]
    %v475 = vld [vmem:[#allocation8 + $0x1d8] sm:$0xff]
    %v476 = vld [vmem:[#allocation8 + $0x1e0] sm:$0xff]
    %v477 = vld [vmem:[#allocation8 + $0x1e8] sm:$0xff]
    %v478 = vld [vmem:[#allocation8 + $0x1f0] sm:$0xff]
    %v479 = vld [vmem:[#allocation8 + $0x1f8] sm:$0xff]
    %v480 = vld [vmem:[#allocation8 + $0x200] sm:$0xff]
    %v481 = vld [vmem:[#allocation8 + $0x208] sm:$0xff]
    %v482 = vld [vmem:[#allocation8 + $0x210] sm:$0xff]
    %v483 = vld [vmem:[#allocation8 + $0x218] sm:$0xff]
    %v484 = vld [vmem:[#allocation8 + $0x220] sm:$0xff]
    %v485 = vld [vmem:[#allocation8 + $0x228] sm:$0xff]
    %v486 = vld [vmem:[#allocation8 + $0x230] sm:$0xff]
    %v487 = vld [vmem:[#allocation8 + $0x238] sm:$0xff]
    %v488 = vld [vmem:[#allocation8 + $0x240] sm:$0xff]
    %v489 = vld [vmem:[#allocation8 + $0x248] sm:$0xff]
    %v490 = vld [vmem:[#allocation8 + $0x250] sm:$0xff]
    %v491 = vld [vmem:[#allocation8 + $0x258] sm:$0xff]
    %v492 = vld [vmem:[#allocation8 + $0x260] sm:$0xff]
    %v493 = vld [vmem:[#allocation8 + $0x268] sm:$0xff]
    %v494 = vld [vmem:[#allocation8 + $0x270] sm:$0xff]
    %v495 = vld [vmem:[#allocation8 + $0x278] sm:$0xff]
    %v496 = vld [vmem:[#allocation8 + $0x280] sm:$0xff]
    %v497 = vld [vmem:[#allocation8 + $0x288] sm:$0xff]
    %v498 = vld [vmem:[#allocation8 + $0x290] sm:$0xff]
    %v499 = vld [vmem:[#allocation8 + $0x298] sm:$0xff]
    %v500 = vld [vmem:[#allocation8 + $0x2a0] sm:$0xff]
    %v501 = vld [vmem:[#allocation8 + $0x2a8] sm:$0xff]
    %v502 = vld [vmem:[#allocation8 + $0x2b0] sm:$0xff]
    %v503 = vld [vmem:[#allocation8 + $0x2b8] sm:$0xff]
    %v504 = vld [vmem:[#allocation8 + $0x2c0] sm:$0xff]
    %v505 = vld [vmem:[#allocation8 + $0x2c8] sm:$0xff]
    %v506 = vld [vmem:[#allocation8 + $0x2d0] sm:$0xff]
    %v507 = vld [vmem:[#allocation8 + $0x2d8] sm:$0xff]
    %v508 = vld [vmem:[#allocation8 + $0x2e0] sm:$0xff]
    %v509 = vld [vmem:[#allocation8 + $0x2e8] sm:$0xff]
    %v510 = vld [vmem:[#allocation8 + $0x2f0] sm:$0xff]
    %v511 = vld [vmem:[#allocation8 + $0x2f8] sm:$0xff]
    %v512 = vld [vmem:[#allocation8 + $0x300] sm:$0xff]
    %v513 = vld [vmem:[#allocation8 + $0x308] sm:$0xff]
    %v514 = vld [vmem:[#allocation8 + $0x310] sm:$0xff]
    %v515 = vld [vmem:[#allocation8 + $0x318] sm:$0xff]
    %v516 = vld [vmem:[#allocation8 + $0x320] sm:$0xff]
    %v517 = vld [vmem:[#allocation8 + $0x328] sm:$0xff]
    %v518 = vld [vmem:[#allocation8 + $0x330] sm:$0xff]
    %v519 = vld [vmem:[#allocation8 + $0x338] sm:$0xff]
    %v520 = vld [vmem:[#allocation8 + $0x340] sm:$0xff]
    %v521 = vld [vmem:[#allocation8 + $0x348] sm:$0xff]
    %v522 = vld [vmem:[#allocation8 + $0x350] sm:$0xff]
    %v523 = vld [vmem:[#allocation8 + $0x358] sm:$0xff]
    %v524 = vld [vmem:[#allocation8 + $0x360] sm:$0xff]
    %v525 = vld [vmem:[#allocation8 + $0x368] sm:$0xff]
    %v526 = vld [vmem:[#allocation8 + $0x370] sm:$0xff]
    %v527 = vld [vmem:[#allocation8 + $0x378] sm:$0xff]
    %v528 = vld [vmem:[#allocation8 + $0x380] sm:$0xff]
    %v529 = vld [vmem:[#allocation8 + $0x388] sm:$0xff]
    %v530 = vld [vmem:[#allocation8 + $0x390] sm:$0xff]
    %v531 = vld [vmem:[#allocation8 + $0x398] sm:$0xff]
    %v532 = vld [vmem:[#allocation8 + $0x3a0] sm:$0xff]
    %v533 = vld [vmem:[#allocation8 + $0x3a8] sm:$0xff]
    %v534 = vld [vmem:[#allocation8 + $0x3b0] sm:$0xff]
    %v535 = vld [vmem:[#allocation8 + $0x3b8] sm:$0xff]
    %v536 = vld [vmem:[#allocation8 + $0x3c0] sm:$0xff]
    %v537 = vld [vmem:[#allocation8 + $0x3c8] sm:$0xff]
    %v538 = vld [vmem:[#allocation8 + $0x3d0] sm:$0xff]
    %v539 = vld [vmem:[#allocation8 + $0x3d8] sm:$0xff]
    %v540 = vld [vmem:[#allocation8 + $0x3e0] sm:$0xff]
    %v541 = vld [vmem:[#allocation8 + $0x3e8] sm:$0xff]
    %v542 = vld [vmem:[#allocation8 + $0x3f0] sm:$0xff]
    %v543 = vld [vmem:[#allocation8 + $0x3f8] sm:$0xff]
    %v544 = vld [vmem:[%s4] sm:$0x3]
    %v546 = vlaneseq
    %v547 = vshrl.u32 %v546, 7
    %v548 = vsub.s32 0, %v547
    %v549 = vrot.slane %v544, %v548
    %v550 = vlaneseq
    %v551 = vshrl.u32 %v550, 7
    %v552 = vsub.s32 1, %v551
    %v553 = vrot.slane %v544, %v552
    %v684 = vunpack.c.l.b16 %v416
    %v685 = vunpack.c.h.b16 %v416
    %v686 = vunpack.c.l.b16 %v417
    %v687 = vunpack.c.h.b16 %v417
    %v688 = vunpack.c.l.b16 %v418
    %v689 = vunpack.c.h.b16 %v418
    %v690 = vunpack.c.l.b16 %v419
    %v691 = vunpack.c.h.b16 %v419
    %v692 = vunpack.c.l.b16 %v420
    %v693 = vunpack.c.h.b16 %v420
    %v694 = vunpack.c.l.b16 %v421
    %v695 = vunpack.c.h.b16 %v421
    %v696 = vunpack.c.l.b16 %v422
    %v697 = vunpack.c.h.b16 %v422
    %v698 = vunpack.c.l.b16 %v423
    %v699 = vunpack.c.h.b16 %v423
    %v700 = vunpack.c.l.b16 %v424
    %v701 = vunpack.c.h.b16 %v424
    %v702 = vunpack.c.l.b16 %v425
    %v703 = vunpack.c.h.b16 %v425
    %v704 = vunpack.c.l.b16 %v426
    %v705 = vunpack.c.h.b16 %v426
    %v706 = vunpack.c.l.b16 %v427
    %v707 = vunpack.c.h.b16 %v427
    %v708 = vunpack.c.l.b16 %v428
    %v709 = vunpack.c.h.b16 %v428
    %v710 = vunpack.c.l.b16 %v429
    %v711 = vunpack.c.h.b16 %v429
    %v712 = vunpack.c.l.b16 %v430
    %v713 = vunpack.c.h.b16 %v430
    %v714 = vunpack.c.l.b16 %v431
    %v715 = vunpack.c.h.b16 %v431
    %v716 = vunpack.c.l.b16 %v432
    %v717 = vunpack.c.h.b16 %v432
    %v718 = vunpack.c.l.b16 %v433
    %v719 = vunpack.c.h.b16 %v433
    %v720 = vunpack.c.l.b16 %v434
    %v721 = vunpack.c.h.b16 %v434
    %v722 = vunpack.c.l.b16 %v435
    %v723 = vunpack.c.h.b16 %v435
    %v724 = vunpack.c.l.b16 %v436
    %v725 = vunpack.c.h.b16 %v436
    %v726 = vunpack.c.l.b16 %v437
    %v727 = vunpack.c.h.b16 %v437
    %v728 = vunpack.c.l.b16 %v438
    %v729 = vunpack.c.h.b16 %v438
    %v730 = vunpack.c.l.b16 %v439
    %v731 = vunpack.c.h.b16 %v439
    %v732 = vunpack.c.l.b16 %v440
    %v733 = vunpack.c.h.b16 %v440
    %v734 = vunpack.c.l.b16 %v441
    %v735 = vunpack.c.h.b16 %v441
    %v736 = vunpack.c.l.b16 %v442
    %v737 = vunpack.c.h.b16 %v442
    %v738 = vunpack.c.l.b16 %v443
    %v739 = vunpack.c.h.b16 %v443
    %v740 = vunpack.c.l.b16 %v444
    %v741 = vunpack.c.h.b16 %v444
    %v742 = vunpack.c.l.b16 %v445
    %v743 = vunpack.c.h.b16 %v445
    %v744 = vunpack.c.l.b16 %v446
    %v745 = vunpack.c.h.b16 %v446
    %v746 = vunpack.c.l.b16 %v447
    %v747 = vunpack.c.h.b16 %v447
    %v748 = vunpack.c.l.b16 %v448
    %v749 = vunpack.c.h.b16 %v448
    %v750 = vunpack.c.l.b16 %v449
    %v751 = vunpack.c.h.b16 %v449
    %v752 = vunpack.c.l.b16 %v450
    %v753 = vunpack.c.h.b16 %v450
    %v754 = vunpack.c.l.b16 %v451
    %v755 = vunpack.c.h.b16 %v451
    %v756 = vunpack.c.l.b16 %v452
    %v757 = vunpack.c.h.b16 %v452
    %v758 = vunpack.c.l.b16 %v453
    %v759 = vunpack.c.h.b16 %v453
    %v760 = vunpack.c.l.b16 %v454
    %v761 = vunpack.c.h.b16 %v454
    %v762 = vunpack.c.l.b16 %v455
    %v763 = vunpack.c.h.b16 %v455
    %v764 = vunpack.c.l.b16 %v456
    %v765 = vunpack.c.h.b16 %v456
    %v766 = vunpack.c.l.b16 %v457
    %v767 = vunpack.c.h.b16 %v457
    %v768 = vunpack.c.l.b16 %v458
    %v769 = vunpack.c.h.b16 %v458
    %v770 = vunpack.c.l.b16 %v459
    %v771 = vunpack.c.h.b16 %v459
    %v772 = vunpack.c.l.b16 %v460
    %v773 = vunpack.c.h.b16 %v460
    %v774 = vunpack.c.l.b16 %v461
    %v775 = vunpack.c.h.b16 %v461
    %v776 = vunpack.c.l.b16 %v462
    %v777 = vunpack.c.h.b16 %v462
    %v778 = vunpack.c.l.b16 %v463
    %v779 = vunpack.c.h.b16 %v463
    %v780 = vunpack.c.l.b16 %v464
    %v781 = vunpack.c.h.b16 %v464
    %v782 = vunpack.c.l.b16 %v465
    %v783 = vunpack.c.h.b16 %v465
    %v784 = vunpack.c.l.b16 %v466
    %v785 = vunpack.c.h.b16 %v466
    %v786 = vunpack.c.l.b16 %v467
    %v787 = vunpack.c.h.b16 %v467
    %v788 = vunpack.c.l.b16 %v468
    %v789 = vunpack.c.h.b16 %v468
    %v790 = vunpack.c.l.b16 %v469
    %v791 = vunpack.c.h.b16 %v469
    %v792 = vunpack.c.l.b16 %v470
    %v793 = vunpack.c.h.b16 %v470
    %v794 = vunpack.c.l.b16 %v471
    %v795 = vunpack.c.h.b16 %v471
    %v796 = vunpack.c.l.b16 %v472
    %v797 = vunpack.c.h.b16 %v472
    %v798 = vunpack.c.l.b16 %v473
    %v799 = vunpack.c.h.b16 %v473
    %v800 = vunpack.c.l.b16 %v474
    %v801 = vunpack.c.h.b16 %v474
    %v802 = vunpack.c.l.b16 %v475
    %v803 = vunpack.c.h.b16 %v475
    %v804 = vunpack.c.l.b16 %v476
    %v805 = vunpack.c.h.b16 %v476
    %v806 = vunpack.c.l.b16 %v477
    %v807 = vunpack.c.h.b16 %v477
    %v808 = vunpack.c.l.b16 %v478
    %v809 = vunpack.c.h.b16 %v478
    %v810 = vunpack.c.l.b16 %v479
    %v811 = vunpack.c.h.b16 %v479
    %v812 = vunpack.c.l.b16 %v480
    %v813 = vunpack.c.h.b16 %v480
    %v814 = vunpack.c.l.b16 %v481
    %v815 = vunpack.c.h.b16 %v481
    %v816 = vunpack.c.l.b16 %v482
    %v817 = vunpack.c.h.b16 %v482
    %v818 = vunpack.c.l.b16 %v483
    %v819 = vunpack.c.h.b16 %v483
    %v820 = vunpack.c.l.b16 %v484
    %v821 = vunpack.c.h.b16 %v484
    %v822 = vunpack.c.l.b16 %v485
    %v823 = vunpack.c.h.b16 %v485
    %v824 = vunpack.c.l.b16 %v486
    %v825 = vunpack.c.h.b16 %v486
    %v826 = vunpack.c.l.b16 %v487
    %v827 = vunpack.c.h.b16 %v487
    %v828 = vunpack.c.l.b16 %v488
    %v829 = vunpack.c.h.b16 %v488
    %v830 = vunpack.c.l.b16 %v489
    %v831 = vunpack.c.h.b16 %v489
    %v832 = vunpack.c.l.b16 %v490
    %v833 = vunpack.c.h.b16 %v490
    %v834 = vunpack.c.l.b16 %v491
    %v835 = vunpack.c.h.b16 %v491
    %v836 = vunpack.c.l.b16 %v492
    %v837 = vunpack.c.h.b16 %v492
    %v838 = vunpack.c.l.b16 %v493
    %v839 = vunpack.c.h.b16 %v493
    %v840 = vunpack.c.l.b16 %v494
    %v841 = vunpack.c.h.b16 %v494
    %v842 = vunpack.c.l.b16 %v495
    %v843 = vunpack.c.h.b16 %v495
    %v844 = vunpack.c.l.b16 %v496
    %v845 = vunpack.c.h.b16 %v496
    %v846 = vunpack.c.l.b16 %v497
    %v847 = vunpack.c.h.b16 %v497
    %v848 = vunpack.c.l.b16 %v498
    %v849 = vunpack.c.h.b16 %v498
    %v850 = vunpack.c.l.b16 %v499
    %v851 = vunpack.c.h.b16 %v499
    %v852 = vunpack.c.l.b16 %v500
    %v853 = vunpack.c.h.b16 %v500
    %v854 = vunpack.c.l.b16 %v501
    %v855 = vunpack.c.h.b16 %v501
    %v856 = vunpack.c.l.b16 %v502
    %v857 = vunpack.c.h.b16 %v502
    %v858 = vunpack.c.l.b16 %v503
    %v859 = vunpack.c.h.b16 %v503
    %v860 = vunpack.c.l.b16 %v504
    %v861 = vunpack.c.h.b16 %v504
    %v862 = vunpack.c.l.b16 %v505
    %v863 = vunpack.c.h.b16 %v505
    %v864 = vunpack.c.l.b16 %v506
    %v865 = vunpack.c.h.b16 %v506
    %v866 = vunpack.c.l.b16 %v507
    %v867 = vunpack.c.h.b16 %v507
    %v868 = vunpack.c.l.b16 %v508
    %v869 = vunpack.c.h.b16 %v508
    %v870 = vunpack.c.l.b16 %v509
    %v871 = vunpack.c.h.b16 %v509
    %v872 = vunpack.c.l.b16 %v510
    %v873 = vunpack.c.h.b16 %v510
    %v874 = vunpack.c.l.b16 %v511
    %v875 = vunpack.c.h.b16 %v511
    %v876 = vunpack.c.l.b16 %v512
    %v877 = vunpack.c.h.b16 %v512
    %v878 = vunpack.c.l.b16 %v513
    %v879 = vunpack.c.h.b16 %v513
    %v880 = vunpack.c.l.b16 %v514
    %v881 = vunpack.c.h.b16 %v514
    %v882 = vunpack.c.l.b16 %v515
    %v883 = vunpack.c.h.b16 %v515
    %v884 = vunpack.c.l.b16 %v516
    %v885 = vunpack.c.h.b16 %v516
    %v886 = vunpack.c.l.b16 %v517
    %v887 = vunpack.c.h.b16 %v517
    %v888 = vunpack.c.l.b16 %v518
    %v889 = vunpack.c.h.b16 %v518
    %v890 = vunpack.c.l.b16 %v519
    %v891 = vunpack.c.h.b16 %v519
    %v892 = vunpack.c.l.b16 %v520
    %v893 = vunpack.c.h.b16 %v520
    %v894 = vunpack.c.l.b16 %v521
    %v895 = vunpack.c.h.b16 %v521
    %v896 = vunpack.c.l.b16 %v522
    %v897 = vunpack.c.h.b16 %v522
    %v898 = vunpack.c.l.b16 %v523
    %v899 = vunpack.c.h.b16 %v523
    %v900 = vunpack.c.l.b16 %v524
    %v901 = vunpack.c.h.b16 %v524
    %v902 = vunpack.c.l.b16 %v525
    %v903 = vunpack.c.h.b16 %v525
    %v904 = vunpack.c.l.b16 %v526
    %v905 = vunpack.c.h.b16 %v526
    %v906 = vunpack.c.l.b16 %v527
    %v907 = vunpack.c.h.b16 %v527
    %v908 = vunpack.c.l.b16 %v528
    %v909 = vunpack.c.h.b16 %v528
    %v910 = vunpack.c.l.b16 %v529
    %v911 = vunpack.c.h.b16 %v529
    %v912 = vunpack.c.l.b16 %v530
    %v913 = vunpack.c.h.b16 %v530
    %v914 = vunpack.c.l.b16 %v531
    %v915 = vunpack.c.h.b16 %v531
    %v916 = vunpack.c.l.b16 %v532
    %v917 = vunpack.c.h.b16 %v532
    %v918 = vunpack.c.l.b16 %v533
    %v919 = vunpack.c.h.b16 %v533
    %v920 = vunpack.c.l.b16 %v534
    %v921 = vunpack.c.h.b16 %v534
    %v922 = vunpack.c.l.b16 %v535
    %v923 = vunpack.c.h.b16 %v535
    %v924 = vunpack.c.l.b16 %v536
    %v925 = vunpack.c.h.b16 %v536
    %v926 = vunpack.c.l.b16 %v537
    %v927 = vunpack.c.h.b16 %v537
    %v928 = vunpack.c.l.b16 %v538
    %v929 = vunpack.c.h.b16 %v538
    %v930 = vunpack.c.l.b16 %v539
    %v931 = vunpack.c.h.b16 %v539
    %v932 = vunpack.c.l.b16 %v540
    %v933 = vunpack.c.h.b16 %v540
    %v934 = vunpack.c.l.b16 %v541
    %v935 = vunpack.c.h.b16 %v541
    %v936 = vunpack.c.l.b16 %v542
    %v937 = vunpack.c.h.b16 %v542
    %v938 = vunpack.c.l.b16 %v543
    %v939 = vunpack.c.h.b16 %v543
    %v940 = vpack.c.b16 %v686, %v684
    %v941 = vpack.c.b16 %v687, %v685
    %v942 = vpack.c.b16 %v690, %v688
    %v943 = vpack.c.b16 %v691, %v689
    %v944 = vpack.c.b16 %v694, %v692
    %v945 = vpack.c.b16 %v695, %v693
    %v946 = vpack.c.b16 %v698, %v696
    %v947 = vpack.c.b16 %v699, %v697
    %v948 = vpack.c.b16 %v702, %v700
    %v949 = vpack.c.b16 %v703, %v701
    %v950 = vpack.c.b16 %v706, %v704
    %v951 = vpack.c.b16 %v707, %v705
    %v952 = vpack.c.b16 %v710, %v708
    %v953 = vpack.c.b16 %v711, %v709
    %v954 = vpack.c.b16 %v714, %v712
    %v955 = vpack.c.b16 %v715, %v713
    %v956 = vpack.c.b16 %v718, %v716
    %v957 = vpack.c.b16 %v719, %v717
    %v958 = vpack.c.b16 %v722, %v720
    %v959 = vpack.c.b16 %v723, %v721
    %v960 = vpack.c.b16 %v726, %v724
    %v961 = vpack.c.b16 %v727, %v725
    %v962 = vpack.c.b16 %v730, %v728
    %v963 = vpack.c.b16 %v731, %v729
    %v964 = vpack.c.b16 %v734, %v732
    %v965 = vpack.c.b16 %v735, %v733
    %v966 = vpack.c.b16 %v738, %v736
    %v967 = vpack.c.b16 %v739, %v737
    %v968 = vpack.c.b16 %v742, %v740
    %v969 = vpack.c.b16 %v743, %v741
    %v970 = vpack.c.b16 %v746, %v744
    %v971 = vpack.c.b16 %v747, %v745
    %v972 = vpack.c.b16 %v750, %v748
    %v973 = vpack.c.b16 %v751, %v749
    %v974 = vpack.c.b16 %v754, %v752
    %v975 = vpack.c.b16 %v755, %v753
    %v976 = vpack.c.b16 %v758, %v756
    %v977 = vpack.c.b16 %v759, %v757
    %v978 = vpack.c.b16 %v762, %v760
    %v979 = vpack.c.b16 %v763, %v761
    %v980 = vpack.c.b16 %v766, %v764
    %v981 = vpack.c.b16 %v767, %v765
    %v982 = vpack.c.b16 %v770, %v768
    %v983 = vpack.c.b16 %v771, %v769
    %v984 = vpack.c.b16 %v774, %v772
    %v985 = vpack.c.b16 %v775, %v773
    %v986 = vpack.c.b16 %v778, %v776
    %v987 = vpack.c.b16 %v779, %v777
    %v988 = vpack.c.b16 %v782, %v780
    %v989 = vpack.c.b16 %v783, %v781
    %v990 = vpack.c.b16 %v786, %v784
    %v991 = vpack.c.b16 %v787, %v785
    %v992 = vpack.c.b16 %v790, %v788
    %v993 = vpack.c.b16 %v791, %v789
    %v994 = vpack.c.b16 %v794, %v792
    %v995 = vpack.c.b16 %v795, %v793
    %v996 = vpack.c.b16 %v798, %v796
    %v997 = vpack.c.b16 %v799, %v797
    %v998 = vpack.c.b16 %v802, %v800
    %v999 = vpack.c.b16 %v803, %v801
    %v1000 = vpack.c.b16 %v806, %v804
    %v1001 = vpack.c.b16 %v807, %v805
    %v1002 = vpack.c.b16 %v810, %v808
    %v1003 = vpack.c.b16 %v811, %v809
    %v1004 = vpack.c.b16 %v814, %v812
    %v1005 = vpack.c.b16 %v815, %v813
    %v1006 = vpack.c.b16 %v818, %v816
    %v1007 = vpack.c.b16 %v819, %v817
    %v1008 = vpack.c.b16 %v822, %v820
    %v1009 = vpack.c.b16 %v823, %v821
    %v1010 = vpack.c.b16 %v826, %v824
    %v1011 = vpack.c.b16 %v827, %v825
    %v1012 = vpack.c.b16 %v830, %v828
    %v1013 = vpack.c.b16 %v831, %v829
    %v1014 = vpack.c.b16 %v834, %v832
    %v1015 = vpack.c.b16 %v835, %v833
    %v1016 = vpack.c.b16 %v838, %v836
    %v1017 = vpack.c.b16 %v839, %v837
    %v1018 = vpack.c.b16 %v842, %v840
    %v1019 = vpack.c.b16 %v843, %v841
    %v1020 = vpack.c.b16 %v846, %v844
    %v1021 = vpack.c.b16 %v847, %v845
    %v1022 = vpack.c.b16 %v850, %v848
    %v1023 = vpack.c.b16 %v851, %v849
    %v1024 = vpack.c.b16 %v854, %v852
    %v1025 = vpack.c.b16 %v855, %v853
    %v1026 = vpack.c.b16 %v858, %v856
    %v1027 = vpack.c.b16 %v859, %v857
    %v1028 = vpack.c.b16 %v862, %v860
    %v1029 = vpack.c.b16 %v863, %v861
    %v1030 = vpack.c.b16 %v866, %v864
    %v1031 = vpack.c.b16 %v867, %v865
    %v1032 = vpack.c.b16 %v870, %v868
    %v1033 = vpack.c.b16 %v871, %v869
    %v1034 = vpack.c.b16 %v874, %v872
    %v1035 = vpack.c.b16 %v875, %v873
    %v1036 = vpack.c.b16 %v878, %v876
    %v1037 = vpack.c.b16 %v879, %v877
    %v1038 = vpack.c.b16 %v882, %v880
    %v1039 = vpack.c.b16 %v883, %v881
    %v1040 = vpack.c.b16 %v886, %v884
    %v1041 = vpack.c.b16 %v887, %v885
    %v1042 = vpack.c.b16 %v890, %v888
    %v1043 = vpack.c.b16 %v891, %v889
    %v1044 = vpack.c.b16 %v894, %v892
    %v1045 = vpack.c.b16 %v895, %v893
    %v1046 = vpack.c.b16 %v898, %v896
    %v1047 = vpack.c.b16 %v899, %v897
    %v1048 = vpack.c.b16 %v902, %v900
    %v1049 = vpack.c.b16 %v903, %v901
    %v1050 = vpack.c.b16 %v906, %v904
    %v1051 = vpack.c.b16 %v907, %v905
    %v1052 = vpack.c.b16 %v910, %v908
    %v1053 = vpack.c.b16 %v911, %v909
    %v1054 = vpack.c.b16 %v914, %v912
    %v1055 = vpack.c.b16 %v915, %v913
    %v1056 = vpack.c.b16 %v918, %v916
    %v1057 = vpack.c.b16 %v919, %v917
    %v1058 = vpack.c.b16 %v922, %v920
    %v1059 = vpack.c.b16 %v923, %v921
    %v1060 = vpack.c.b16 %v926, %v924
    %v1061 = vpack.c.b16 %v927, %v925
    %v1062 = vpack.c.b16 %v930, %v928
    %v1063 = vpack.c.b16 %v931, %v929
    %v1064 = vpack.c.b16 %v934, %v932
    %v1065 = vpack.c.b16 %v935, %v933
    %v1066 = vpack.c.b16 %v938, %v936
    %v1067 = vpack.c.b16 %v939, %v937
    %1196 = vmatprep.subr.bf16.mxu0 %v955
    %1197 = vmatpush1.bf16.msra.mxu0 %v954
    %1198 = vmatprep.subr.bf16.mxu0 %v953
    %1199 = vmatpush1.bf16.msra.mxu0 %v952
    %1200 = vmatprep.subr.bf16.mxu0 %v951
    %1201 = vmatpush1.bf16.msra.mxu0 %v950
    %1202 = vmatprep.subr.bf16.mxu0 %v949
    %1203 = vmatpush1.bf16.msra.mxu0 %v948
    %1204 = vmatprep.subr.bf16.mxu0 %v947
    %1205 = vmatpush1.bf16.msra.mxu0 %v946
    %1206 = vmatprep.subr.bf16.mxu0 %v945
    %1207 = vmatpush1.bf16.msra.mxu0 %v944
    %1208 = vmatprep.subr.bf16.mxu0 %v943
    %1209 = vmatpush1.bf16.msra.mxu0 %v942
    %1210 = vmatprep.subr.bf16.mxu0 %v941
    %1211 = vmatpush1.bf16.msra.mxu0 %v940
    %1212 = vmatprep.subr.bf16.mxu0 %v971
    %1213 = vmatpush2.bf16.msra.mxu0 %v970
    %1214 = vmatprep.subr.bf16.mxu0 %v969
    %1215 = vmatpush2.bf16.msra.mxu0 %v968
    %1216 = vmatprep.subr.bf16.mxu0 %v967
    %1217 = vmatpush2.bf16.msra.mxu0 %v966
    %1218 = vmatprep.subr.bf16.mxu0 %v965
    %1219 = vmatpush2.bf16.msra.mxu0 %v964
    %1220 = vmatprep.subr.bf16.mxu0 %v963
    %1221 = vmatpush2.bf16.msra.mxu0 %v962
    %1222 = vmatprep.subr.bf16.mxu0 %v961
    %1223 = vmatpush2.bf16.msra.mxu0 %v960
    %1224 = vmatprep.subr.bf16.mxu0 %v959
    %1225 = vmatpush2.bf16.msra.mxu0 %v958
    %1226 = vmatprep.subr.bf16.mxu0 %v957
    %1227 = vmatpush2.bf16.msra.mxu0 %v956
    %1228 = vmatprep.mubr.bf16.mxu0 %v409
    %1229 = vmatmul.mubr.bf16.gmra.mxu0 %v408
    %v1230 = vpop.f32.mrf.mxu0
    %v1231 = vadd.f32 %v549, %v1230
    %v1232 = vpop.f32.mrf.mxu0
    %v1233 = vadd.f32 %v553, %v1232
    %v1234 = vpop.f32.mrf.mxu0
    %v1235 = vpop.f32.mrf.mxu0
    %1236 = vdwg.mxu0
    %1237 = vmatprep.subr.bf16.mxu0 %v987
    %1238 = vmatpush1.bf16.msra.mxu0 %v986
    %1239 = vmatprep.subr.bf16.mxu0 %v985
    %1240 = vmatpush1.bf16.msra.mxu0 %v984
    %1241 = vmatprep.subr.bf16.mxu0 %v983
    %1242 = vmatpush1.bf16.msra.mxu0 %v982
    %1243 = vmatprep.subr.bf16.mxu0 %v981
    %1244 = vmatpush1.bf16.msra.mxu0 %v980
    %1245 = vmatprep.subr.bf16.mxu0 %v979
    %1246 = vmatpush1.bf16.msra.mxu0 %v978
    %1247 = vmatprep.subr.bf16.mxu0 %v977
    %1248 = vmatpush1.bf16.msra.mxu0 %v976
    %1249 = vmatprep.subr.bf16.mxu0 %v975
    %1250 = vmatpush1.bf16.msra.mxu0 %v974
    %1251 = vmatprep.subr.bf16.mxu0 %v973
    %1252 = vmatpush1.bf16.msra.mxu0 %v972
    %1253 = vmatprep.subr.bf16.mxu0 %v1003
    %1254 = vmatpush2.bf16.msra.mxu0 %v1002
    %1255 = vmatprep.subr.bf16.mxu0 %v1001
    %1256 = vmatpush2.bf16.msra.mxu0 %v1000
    %1257 = vmatprep.subr.bf16.mxu0 %v999
    %1258 = vmatpush2.bf16.msra.mxu0 %v998
    %1259 = vmatprep.subr.bf16.mxu0 %v997
    %1260 = vmatpush2.bf16.msra.mxu0 %v996
    %1261 = vmatprep.subr.bf16.mxu0 %v995
    %1262 = vmatpush2.bf16.msra.mxu0 %v994
    %1263 = vmatprep.subr.bf16.mxu0 %v993
    %1264 = vmatpush2.bf16.msra.mxu0 %v992
    %1265 = vmatprep.subr.bf16.mxu0 %v991
    %1266 = vmatpush2.bf16.msra.mxu0 %v990
    %1267 = vmatprep.subr.bf16.mxu0 %v989
    %1268 = vmatpush2.bf16.msra.mxu0 %v988
    %1269 = vmatprep.mubr.bf16.mxu0 %v411
    %1270 = vmatmul.mubr.bf16.gmra.mxu0 %v410
    %v1271 = vpop.f32.mrf.mxu0
    %v1272 = vadd.f32 %v1231, %v1271
    %v1273 = vpop.f32.mrf.mxu0
    %v1274 = vadd.f32 %v1233, %v1273
    %v1275 = vpop.f32.mrf.mxu0
    %v1276 = vpop.f32.mrf.mxu0
    %1277 = vdwg.mxu0
    %1278 = vmatprep.subr.bf16.mxu0 %v1019
    %1279 = vmatpush1.bf16.msra.mxu0 %v1018
    %1280 = vmatprep.subr.bf16.mxu0 %v1017
    %1281 = vmatpush1.bf16.msra.mxu0 %v1016
    %1282 = vmatprep.subr.bf16.mxu0 %v1015
    %1283 = vmatpush1.bf16.msra.mxu0 %v1014
    %1284 = vmatprep.subr.bf16.mxu0 %v1013
    %1285 = vmatpush1.bf16.msra.mxu0 %v1012
    %1286 = vmatprep.subr.bf16.mxu0 %v1011
    %1287 = vmatpush1.bf16.msra.mxu0 %v1010
    %1288 = vmatprep.subr.bf16.mxu0 %v1009
    %1289 = vmatpush1.bf16.msra.mxu0 %v1008
    %1290 = vmatprep.subr.bf16.mxu0 %v1007
    %1291 = vmatpush1.bf16.msra.mxu0 %v1006
    %1292 = vmatprep.subr.bf16.mxu0 %v1005
    %1293 = vmatpush1.bf16.msra.mxu0 %v1004
    %1294 = vmatprep.subr.bf16.mxu0 %v1035
    %1295 = vmatpush2.bf16.msra.mxu0 %v1034
    %1296 = vmatprep.subr.bf16.mxu0 %v1033
    %1297 = vmatpush2.bf16.msra.mxu0 %v1032
    %1298 = vmatprep.subr.bf16.mxu0 %v1031
    %1299 = vmatpush2.bf16.msra.mxu0 %v1030
    %1300 = vmatprep.subr.bf16.mxu0 %v1029
    %1301 = vmatpush2.bf16.msra.mxu0 %v1028
    %1302 = vmatprep.subr.bf16.mxu0 %v1027
    %1303 = vmatpush2.bf16.msra.mxu0 %v1026
    %1304 = vmatprep.subr.bf16.mxu0 %v1025
    %1305 = vmatpush2.bf16.msra.mxu0 %v1024
    %1306 = vmatprep.subr.bf16.mxu0 %v1023
    %1307 = vmatpush2.bf16.msra.mxu0 %v1022
    %1308 = vmatprep.subr.bf16.mxu0 %v1021
    %1309 = vmatpush2.bf16.msra.mxu0 %v1020
    %1310 = vmatprep.mubr.bf16.mxu0 %v413
    %1311 = vmatmul.mubr.bf16.gmra.mxu0 %v412
    %v1312 = vpop.f32.mrf.mxu0
    %v1313 = vadd.f32 %v1272, %v1312
    %v1314 = vpop.f32.mrf.mxu0
    %v1315 = vadd.f32 %v1274, %v1314
    %v1316 = vpop.f32.mrf.mxu0
    %v1317 = vpop.f32.mrf.mxu0
    %1318 = vdwg.mxu0
    %1319 = vmatprep.subr.bf16.mxu0 %v1051
    %1320 = vmatpush1.bf16.msra.mxu0 %v1050
    %1321 = vmatprep.subr.bf16.mxu0 %v1049
    %1322 = vmatpush1.bf16.msra.mxu0 %v1048
    %1323 = vmatprep.subr.bf16.mxu0 %v1047
    %1324 = vmatpush1.bf16.msra.mxu0 %v1046
    %1325 = vmatprep.subr.bf16.mxu0 %v1045
    %1326 = vmatpush1.bf16.msra.mxu0 %v1044
    %1327 = vmatprep.subr.bf16.mxu0 %v1043
    %1328 = vmatpush1.bf16.msra.mxu0 %v1042
    %1329 = vmatprep.subr.bf16.mxu0 %v1041
    %1330 = vmatpush1.bf16.msra.mxu0 %v1040
    %1331 = vmatprep.subr.bf16.mxu0 %v1039
    %1332 = vmatpush1.bf16.msra.mxu0 %v1038
    %1333 = vmatprep.subr.bf16.mxu0 %v1037
    %1334 = vmatpush1.bf16.msra.mxu0 %v1036
    %1335 = vmatprep.subr.bf16.mxu0 %v1067
    %1336 = vmatpush2.bf16.msra.mxu0 %v1066
    %1337 = vmatprep.subr.bf16.mxu0 %v1065
    %1338 = vmatpush2.bf16.msra.mxu0 %v1064
    %1339 = vmatprep.subr.bf16.mxu0 %v1063
    %1340 = vmatpush2.bf16.msra.mxu0 %v1062
    %1341 = vmatprep.subr.bf16.mxu0 %v1061
    %1342 = vmatpush2.bf16.msra.mxu0 %v1060
    %1343 = vmatprep.subr.bf16.mxu0 %v1059
    %1344 = vmatpush2.bf16.msra.mxu0 %v1058
    %1345 = vmatprep.subr.bf16.mxu0 %v1057
    %1346 = vmatpush2.bf16.msra.mxu0 %v1056
    %1347 = vmatprep.subr.bf16.mxu0 %v1055
    %1348 = vmatpush2.bf16.msra.mxu0 %v1054
    %1349 = vmatprep.subr.bf16.mxu0 %v1053
    %1350 = vmatpush2.bf16.msra.mxu0 %v1052
    %1351 = vmatprep.mubr.bf16.mxu0 %v415
    %1352 = vmatmul.mubr.bf16.gmra.mxu0 %v414
    %v1353 = vpop.f32.mrf.mxu0
    %v1354 = vadd.f32 %v1313, %v1353
    %v1355 = vpop.f32.mrf.mxu0
    %v1356 = vadd.f32 %v1315, %v1355
    %v1357 = vpop.f32.mrf.mxu0
    %v1358 = vpop.f32.mrf.mxu0
    %1359 = vdwg.mxu0
    %v1360 = vmax.f32 %v1354, 0.0
    %v1361 = vmax.f32 %v1356, 0.0
    %v1362 = vpack.c.bf16 %v1360, %v1360
    %v1363 = vpack.c.bf16 %v1361, %v1361
    %v1364 = vld [vmem:[#allocation10] sm:$0xf]
    %v1365 = vld [vmem:[#allocation10 + $0x4] sm:$0xf]
    %v1366 = vld [vmem:[#allocation10 + $0x8] sm:$0xf]
    %v1367 = vld [vmem:[#allocation10 + $0xc] sm:$0xf]
    %v1368 = vld [vmem:[#allocation10 + $0x10] sm:$0xf]
    %v1369 = vld [vmem:[#allocation10 + $0x14] sm:$0xf]
    %v1370 = vld [vmem:[#allocation10 + $0x18] sm:$0xf]
    %v1371 = vld [vmem:[#allocation10 + $0x1c] sm:$0xf]
    %v1372 = vld [vmem:[#allocation10 + $0x20] sm:$0xf]
    %v1373 = vld [vmem:[#allocation10 + $0x24] sm:$0xf]
    %v1374 = vld [vmem:[#allocation10 + $0x28] sm:$0xf]
    %v1375 = vld [vmem:[#allocation10 + $0x2c] sm:$0xf]
    %v1376 = vld [vmem:[#allocation10 + $0x30] sm:$0xf]
    %v1377 = vld [vmem:[#allocation10 + $0x34] sm:$0xf]
    %v1378 = vld [vmem:[#allocation10 + $0x38] sm:$0xf]
    %v1379 = vld [vmem:[#allocation10 + $0x3c] sm:$0xf]
    %v1380 = vld [vmem:[#allocation10 + $0x40] sm:$0xf]
    %v1381 = vld [vmem:[#allocation10 + $0x44] sm:$0xf]
    %v1382 = vld [vmem:[#allocation10 + $0x48] sm:$0xf]
    %v1383 = vld [vmem:[#allocation10 + $0x4c] sm:$0xf]
    %v1384 = vld [vmem:[#allocation10 + $0x50] sm:$0xf]
    %v1385 = vld [vmem:[#allocation10 + $0x54] sm:$0xf]
    %v1386 = vld [vmem:[#allocation10 + $0x58] sm:$0xf]
    %v1387 = vld [vmem:[#allocation10 + $0x5c] sm:$0xf]
    %v1388 = vld [vmem:[#allocation10 + $0x60] sm:$0xf]
    %v1389 = vld [vmem:[#allocation10 + $0x64] sm:$0xf]
    %v1390 = vld [vmem:[#allocation10 + $0x68] sm:$0xf]
    %v1391 = vld [vmem:[#allocation10 + $0x6c] sm:$0xf]
    %v1392 = vld [vmem:[#allocation10 + $0x70] sm:$0xf]
    %v1393 = vld [vmem:[#allocation10 + $0x74] sm:$0xf]
    %v1394 = vld [vmem:[#allocation10 + $0x78] sm:$0xf]
    %v1395 = vld [vmem:[#allocation10 + $0x7c] sm:$0xf]
    %v1396 = vld [vmem:[%s6] sm:$0x1]
    %v1398 = vlaneseq
    %v1399 = vshrl.u32 %v1398, 7
    %v1400 = vsub.s32 0, %v1399
    %v1401 = vrot.slane %v1396, %v1400
    %v1435 = vunpack.c.l.b16 %v1364
    %v1436 = vunpack.c.l.b16 %v1365
    %v1437 = vunpack.c.l.b16 %v1366
    %v1438 = vunpack.c.l.b16 %v1367
    %v1439 = vunpack.c.l.b16 %v1368
    %v1440 = vunpack.c.l.b16 %v1369
    %v1441 = vunpack.c.l.b16 %v1370
    %v1442 = vunpack.c.l.b16 %v1371
    %v1443 = vunpack.c.l.b16 %v1372
    %v1444 = vunpack.c.l.b16 %v1373
    %v1445 = vunpack.c.l.b16 %v1374
    %v1446 = vunpack.c.l.b16 %v1375
    %v1447 = vunpack.c.l.b16 %v1376
    %v1448 = vunpack.c.l.b16 %v1377
    %v1449 = vunpack.c.l.b16 %v1378
    %v1450 = vunpack.c.l.b16 %v1379
    %v1451 = vunpack.c.l.b16 %v1380
    %v1452 = vunpack.c.l.b16 %v1381
    %v1453 = vunpack.c.l.b16 %v1382
    %v1454 = vunpack.c.l.b16 %v1383
    %v1455 = vunpack.c.l.b16 %v1384
    %v1456 = vunpack.c.l.b16 %v1385
    %v1457 = vunpack.c.l.b16 %v1386
    %v1458 = vunpack.c.l.b16 %v1387
    %v1459 = vunpack.c.l.b16 %v1388
    %v1460 = vunpack.c.l.b16 %v1389
    %v1461 = vunpack.c.l.b16 %v1390
    %v1462 = vunpack.c.l.b16 %v1391
    %v1463 = vunpack.c.l.b16 %v1392
    %v1464 = vunpack.c.l.b16 %v1393
    %v1465 = vunpack.c.l.b16 %v1394
    %v1466 = vunpack.c.l.b16 %v1395
    %v1467 = vpack.c.b16 %v1436, %v1435
    %v1468 = vpack.c.b16 %v1438, %v1437
    %v1469 = vpack.c.b16 %v1440, %v1439
    %v1470 = vpack.c.b16 %v1442, %v1441
    %v1471 = vpack.c.b16 %v1444, %v1443
    %v1472 = vpack.c.b16 %v1446, %v1445
    %v1473 = vpack.c.b16 %v1448, %v1447
    %v1474 = vpack.c.b16 %v1450, %v1449
    %v1475 = vpack.c.b16 %v1452, %v1451
    %v1476 = vpack.c.b16 %v1454, %v1453
    %v1477 = vpack.c.b16 %v1456, %v1455
    %v1478 = vpack.c.b16 %v1458, %v1457
    %v1479 = vpack.c.b16 %v1460, %v1459
    %v1480 = vpack.c.b16 %v1462, %v1461
    %v1481 = vpack.c.b16 %v1464, %v1463
    %v1482 = vpack.c.b16 %v1466, %v1465
    %1499 = vmatprep.subr.bf16.mxu0 0
    %1500 = vmatpush1.bf16.msra.mxu0 %v1474
    %1501 = vmatprep.subr.bf16.mxu0 0
    %1502 = vmatpush1.bf16.msra.mxu0 %v1473
    %1503 = vmatprep.subr.bf16.mxu0 0
    %1504 = vmatpush1.bf16.msra.mxu0 %v1472
    %1505 = vmatprep.subr.bf16.mxu0 0
    %1506 = vmatpush1.bf16.msra.mxu0 %v1471
    %1507 = vmatprep.subr.bf16.mxu0 0
    %1508 = vmatpush1.bf16.msra.mxu0 %v1470
    %1509 = vmatprep.subr.bf16.mxu0 0
    %1510 = vmatpush1.bf16.msra.mxu0 %v1469
    %1511 = vmatprep.subr.bf16.mxu0 0
    %1512 = vmatpush1.bf16.msra.mxu0 %v1468
    %1513 = vmatprep.subr.bf16.mxu0 0
    %1514 = vmatpush1.bf16.msra.mxu0 %v1467
    %1515 = vmatprep.subr.bf16.mxu0 0
    %1516 = vmatpush2.bf16.msra.mxu0 %v1482
    %1517 = vmatprep.subr.bf16.mxu0 0
    %1518 = vmatpush2.bf16.msra.mxu0 %v1481
    %1519 = vmatprep.subr.bf16.mxu0 0
    %1520 = vmatpush2.bf16.msra.mxu0 %v1480
    %1521 = vmatprep.subr.bf16.mxu0 0
    %1522 = vmatpush2.bf16.msra.mxu0 %v1479
    %1523 = vmatprep.subr.bf16.mxu0 0
    %1524 = vmatpush2.bf16.msra.mxu0 %v1478
    %1525 = vmatprep.subr.bf16.mxu0 0
    %1526 = vmatpush2.bf16.msra.mxu0 %v1477
    %1527 = vmatprep.subr.bf16.mxu0 0
    %1528 = vmatpush2.bf16.msra.mxu0 %v1476
    %1529 = vmatprep.subr.bf16.mxu0 0
    %1530 = vmatpush2.bf16.msra.mxu0 %v1475
    %1531 = vmatprep.mubr.bf16.mxu0 %v1363
    %1532 = vmatmul.mubr.bf16.gmra.mxu0 %v1362
    %v1533 = vpop.f32.mrf.mxu0
    %v1534 = vadd.f32 %v1401, %v1533
    %v1535 = vpop.f32.mrf.mxu0
    %v1536 = vpop.f32.mrf.mxu0
    %v1537 = vpop.f32.mrf.mxu0
    %1538 = vdwg.mxu0
    %1539 = vst [vmem:[#allocation11] sm:$0xff] %v1534
    // Predicated region
    $region50: #{tpu_custom_call.1} parent=1 // pred_check
      _
    $region51: #{tpu_custom_call.1} parent=1 // pred_check_branch
      %1541 = sbr.rel (0) target = $region53
    $region52: #{tpu_custom_call.1} parent=1 // pred_region
      %s1543 = ssub.s32 128, 128
      %1544 = vsyncadd [#allocation4], %s1543
      %s1546 = sshll.u32 [#allocation11], 4
      %s1547 = int_to_ptr.vmem [resolvable:$true] %s1546
      %1549 = dma.vmem_to_hbm [thread:$0]  %s1547, 128, %s7, [#allocation4]
    $region53: #{tpu_custom_call.1} parent=1 // pred_fallthru
      _
    // Predicated region
    $region54: #{tpu_custom_call.1} parent=1 // pred_check
      _
    $region55: #{tpu_custom_call.1} parent=1 // pred_check_branch
      %1551 = sbr.rel (0) target = $region57
    $region56: #{tpu_custom_call.1} parent=1 // pred_region
      %1552 = dma.done [#allocation4], 128
    $region57: #{tpu_custom_call.1} parent=1 // pred_fallthru
      _
    %1553 = vsyncpa [#allocation3], 1
    %1554 = vsyncpa [#allocation6], 1
    %1555 = vsyncpa [#allocation9], 1
    %1556 = vsyncpa [#allocation4], 1

</llo_original>
